<compile_context>
chip_gen: v7x
topology: tpu7x:2x2x1
jax: 0.10.0
libtpu: 0.0.40
codegen_flags: <defaults>
</compile_context>

<pallas_src>
import functools
import math

import numpy as np
import jax
import jax.numpy as jnp
from jax.experimental import pallas as pl
from jax.experimental.pallas import tpu as pltpu

BBOX_XFORM_CLIP = math.log(1000.0 / 16)


def _round_up(x, m):
    return (x + m - 1) // m * m


# --------------------------------------------------------------------------
# Pallas kernel: fused RPN head (conv3x3 + ReLU + fused 1x1 cls/bbox heads)
# + BoxCoder.decode, one image per grid step.
# --------------------------------------------------------------------------
def _rpn_head_decode_kernel(x_ref, w3_ref, b3_ref, wh_ref, bh_ref, anc_ref,
                            out_ref, *, wp):
    """
    x_ref  : (C, Lin)  bf16  zero-padded feature map of one image, flattened
                             (H+2)*(W+2) row-major, lane-padded to Lin.
    w3_ref : (C, 9C)   bf16  3x3 conv weights (Cout, tap*Cin), taps row-major.
    b3_ref : (C, 1)    f32   conv bias.
    wh_ref : (5G, C)   bf16  fused 1x1 heads; 8-aligned row groups
                             [cls | dx | dy | dw | dh], rows a < A valid.
    bh_ref : (5G, 1)   f32
    anc_ref: (4G, Lc)  f32   anchors, row groups [x1 | y1 | x2 | y2].
    out_ref: (5G, Lc)  f32   row groups [cls_logit | px1 | py1 | px2 | py2].
    wp     : padded image width W+2 (static).
    Lane column j = r*wp + c; only columns with c < W are valid conv outputs,
    the rest are dropped by the JAX glue.
    """
    lc = out_ref.shape[1]
    g = wh_ref.shape[0] // 5

    # 3x3 "same" conv as a single K = 9*C matmul over nine shifted windows.
    x = x_ref[...]                                              # (C, Lin) bf16
    taps = [x[:, ky * wp + kx: ky * wp + kx + lc]
            for ky in range(3) for kx in range(3)]
    patches = jnp.concatenate(taps, axis=0)                     # (9C, Lc) bf16
    hidden = jnp.dot(w3_ref[...], patches,
                     preferred_element_type=jnp.float32)        # (C, Lc) f32
    t = jnp.maximum(hidden + b3_ref[...], 0.0).astype(jnp.bfloat16)

    # Fused objectness + bbox-delta heads: one (5G, C) x (C, Lc) matmul.
    heads = (jnp.dot(wh_ref[...], t, preferred_element_type=jnp.float32)
             + bh_ref[...])                                     # (5G, Lc) f32

    cls = heads[0:g, :]
    dx = heads[g:2 * g, :]
    dy = heads[2 * g:3 * g, :]
    dw = jnp.minimum(heads[3 * g:4 * g, :], BBOX_XFORM_CLIP)
    dh = jnp.minimum(heads[4 * g:5 * g, :], BBOX_XFORM_CLIP)

    anc = anc_ref[...]
    ax1 = anc[0:g, :]
    ay1 = anc[g:2 * g, :]
    ax2 = anc[2 * g:3 * g, :]
    ay2 = anc[3 * g:4 * g, :]
    aw = ax2 - ax1
    ah = ay2 - ay1
    acx = ax1 + 0.5 * aw
    acy = ay1 + 0.5 * ah

    pcx = dx * aw + acx
    pcy = dy * ah + acy
    pw = jnp.exp(dw) * aw
    ph = jnp.exp(dh) * ah

    out_ref[...] = jnp.concatenate(
        [cls,
         pcx - 0.5 * pw, pcy - 0.5 * ph, pcx + 0.5 * pw, pcy + 0.5 * ph],
        axis=0)


def rpn_head_decode_level(x_nchw, params, anchors_t):
    """Fused RPN head + box decode for one feature level.

    x_nchw    : (N, C, H, W) feature map.
    anchors_t : (4G, Lc) f32 anchors in the kernel layout.
    Returns (objectness, proposals): (N, H*W*A) logits and (N, H*W*A, 4)
    decoded boxes, flattened in torchvision (H, W, A) order.
    """
    n, c, h, w = x_nchw.shape
    a = params["num_anchors"]
    g = params["group"]
    wp = w + 2
    lc = anchors_t.shape[1]
    lin = _round_up(lc + 2 * wp + 2, 128)

    # Zero-pad (3x3, pad=1), flatten spatial dims, lane-pad, cast to bf16.
    xp = jnp.pad(x_nchw, ((0, 0), (0, 0), (1, 1), (1, 1)))
    xflat = xp.reshape(n, c, (h + 2) * wp)
    xflat = jnp.pad(xflat, ((0, 0), (0, 0), (0, lin - (h + 2) * wp)))
    xflat = xflat.astype(jnp.bfloat16)

    kernel = functools.partial(_rpn_head_decode_kernel, wp=wp)
    # TODO(synk): for production-sized feature maps add an HW-tile grid axis
    # (overlapping halo blocks need pl.Element / manual DMA) so the per-step
    # VMEM stays inside v7x's 64 MiB; at these demo sizes a full level fits.
    out = pl.pallas_call(
        kernel,
        out_shape=jax.ShapeDtypeStruct((n, 5 * g, lc), jnp.float32),
        grid=(n,),
        in_specs=[
            pl.BlockSpec((None, c, lin), lambda i: (i, 0, 0)),
            pl.BlockSpec((c, 9 * c), lambda i: (0, 0)),
            pl.BlockSpec((c, 1), lambda i: (0, 0)),
            pl.BlockSpec((5 * g, c), lambda i: (0, 0)),
            pl.BlockSpec((5 * g, 1), lambda i: (0, 0)),
            pl.BlockSpec((4 * g, lc), lambda i: (0, 0)),
        ],
        out_specs=pl.BlockSpec((None, 5 * g, lc), lambda i: (i, 0, 0)),
        compiler_params=pltpu.CompilerParams(
            dimension_semantics=("parallel",),
            vmem_limit_bytes=32 * 1024 * 1024),
    )(xflat, params["w3m"], params["b3"], params["wh"], params["bh"],
      anchors_t)

    # Drop padded-width / lane-pad columns and re-layout to torchvision's
    # (H, W, A) flatten order (pure XLA glue on small outputs).
    out = out[:, :, :h * wp].reshape(n, 5, g, h, wp)[:, :, :a, :, :w]
    cls = out[:, 0]                                   # (N, A, H, W)
    boxes = out[:, 1:]                                # (N, 4, A, H, W)
    objectness = jnp.transpose(cls, (0, 2, 3, 1)).reshape(n, h * w * a)
    proposals = jnp.transpose(boxes, (0, 3, 4, 2, 1)).reshape(n, h * w * a, 4)
    return objectness, proposals


# --------------------------------------------------------------------------
# Anchor generation (host numpy, matches torchvision AnchorGenerator)
# --------------------------------------------------------------------------
def _cell_anchors(scale, aspect_ratios):
    ratios = np.asarray(aspect_ratios, dtype=np.float64)
    h_ratios = np.sqrt(ratios)
    w_ratios = 1.0 / h_ratios
    ws = w_ratios * scale
    hs = h_ratios * scale
    base = np.stack([-ws, -hs, ws, hs], axis=1) / 2.0
    return np.round(base).astype(np.float32)                 # (A, 4)


def generate_level_anchors_t(feat_size, image_size, scale, aspect_ratios, g):
    """Per-level anchors in the fused kernel layout: shape (4G, Lc),
    row = coord*G + a, lane column = r*(W+2) + c (only c < W used)."""
    fh, fw = feat_size
    a = len(aspect_ratios)
    wp = fw + 2
    lc = _round_up(fh * wp, 128)
    stride_y = image_size[0] // fh
    stride_x = image_size[1] // fw
    cell = _cell_anchors(scale, aspect_ratios)                # (A, 4)
    sx = np.arange(wp, dtype=np.float32) * stride_x           # incl. pad cols
    sy = np.arange(fh, dtype=np.float32) * stride_y
    yy, xx = np.meshgrid(sy, sx, indexing="ij")
    shifts = np.stack([xx, yy, xx, yy], axis=0).reshape(4, 1, fh * wp)
    anc = shifts + np.transpose(cell)[:, :, None]             # (4, A, fh*wp)
    out = np.zeros((4 * g, lc), dtype=np.float32)
    for coord in range(4):
        out[coord * g:coord * g + a, :fh * wp] = anc[coord]
    return jnp.asarray(out)


# --------------------------------------------------------------------------
# Host-side post-processing helpers (variable-length, data-dependent)
# --------------------------------------------------------------------------
def _clip_boxes_to_image_np(boxes, img_shape):
    h, w = img_shape
    boxes = boxes.copy()
    boxes[:, 0::2] = np.clip(boxes[:, 0::2], 0.0, float(w))
    boxes[:, 1::2] = np.clip(boxes[:, 1::2], 0.0, float(h))
    return boxes


def _remove_small_boxes_np(boxes, min_size):
    ws = boxes[:, 2] - boxes[:, 0]
    hs = boxes[:, 3] - boxes[:, 1]
    return np.where((ws >= min_size) & (hs >= min_size))[0]


def _nms_np(boxes, scores, iou_threshold):
    if boxes.shape[0] == 0:
        return np.zeros((0,), dtype=np.int64)
    x1, y1, x2, y2 = boxes[:, 0], boxes[:, 1], boxes[:, 2], boxes[:, 3]
    areas = (x2 - x1) * (y2 - y1)
    order = np.argsort(-scores, kind="stable")
    suppressed = np.zeros(boxes.shape[0], dtype=bool)
    keep = []
    for pos in range(order.shape[0]):
        i = order[pos]
        if suppressed[i]:
            continue
        keep.append(i)
        rest = order[pos + 1:]
        xx1 = np.maximum(x1[i], x1[rest])
        yy1 = np.maximum(y1[i], y1[rest])
        xx2 = np.minimum(x2[i], x2[rest])
        yy2 = np.minimum(y2[i], y2[rest])
        inter = np.clip(xx2 - xx1, 0, None) * np.clip(yy2 - yy1, 0, None)
        iou = inter / (areas[i] + areas[rest] - inter + 1e-12)
        suppressed[rest[iou > iou_threshold]] = True
    return np.asarray(keep, dtype=np.int64)


def _batched_nms_np(boxes, scores, idxs, iou_threshold):
    if boxes.shape[0] == 0:
        return np.zeros((0,), dtype=np.int64)
    max_coord = boxes.max()
    offsets = idxs.astype(np.float32) * (max_coord + 1.0)
    return _nms_np(boxes + offsets[:, None], scores, iou_threshold)


# --------------------------------------------------------------------------
# RegionProposalNetwork (inference forward)
# --------------------------------------------------------------------------
class RegionProposalNetwork:
    def __init__(self, head_params, scales, aspect_ratios,
                 pre_nms_top_n, post_nms_top_n, nms_thresh, score_thresh=0.0):
        self.head_params = head_params
        self.scales = scales
        self.aspect_ratios = aspect_ratios
        self._pre_nms_top_n = pre_nms_top_n
        self._post_nms_top_n = post_nms_top_n
        self.nms_thresh = nms_thresh
        self.score_thresh = score_thresh
        self.min_size = 0.001
        self.training = False
        # TODO(synk): training-time Matcher / fg-bg sampler / losses are not
        # exercised by this inference forward and are not implemented.

    def pre_nms_top_n(self):
        return self._pre_nms_top_n["training" if self.training else "testing"]

    def post_nms_top_n(self):
        return self._post_nms_top_n["training" if self.training else "testing"]

    def _get_top_n_idx(self, objectness, num_anchors_per_level):
        r, offset = [], 0
        for n in num_anchors_per_level:
            ob = objectness[:, offset:offset + n]
            k = min(self.pre_nms_top_n(), n)
            _, idx = jax.lax.top_k(ob, k)
            r.append(idx + offset)
            offset += n
        return jnp.concatenate(r, axis=1)

    def filter_proposals(self, proposals, objectness, image_shapes,
                         num_anchors_per_level):
        num_images = proposals.shape[0]
        objectness = objectness.reshape(num_images, -1)
        levels = jnp.concatenate(
            [jnp.full((n,), i, dtype=jnp.int32)
             for i, n in enumerate(num_anchors_per_level)])
        levels = jnp.broadcast_to(levels[None, :], objectness.shape)
        top_n_idx = self._get_top_n_idx(objectness, num_anchors_per_level)
        batch_idx = jnp.arange(num_images)[:, None]
        objectness = objectness[batch_idx, top_n_idx]
        levels = levels[batch_idx, top_n_idx]
        proposals = proposals[batch_idx, top_n_idx]
        objectness_prob = jax.nn.sigmoid(objectness)

        # TODO(synk): per-image NMS / small-box filtering produce data-dependent
        # variable-length outputs — no clean Pallas equivalent; done in numpy.
        proposals_np = np.asarray(jax.block_until_ready(proposals))
        scores_np = np.asarray(objectness_prob)
        levels_np = np.asarray(levels)
        final_boxes, final_scores = [], []
        for boxes, scores, lvl, img_shape in zip(proposals_np, scores_np,
                                                 levels_np, image_shapes):
            boxes = _clip_boxes_to_image_np(boxes, img_shape)
            keep = _remove_small_boxes_np(boxes, self.min_size)
            boxes, scores, lvl = boxes[keep], scores[keep], lvl[keep]
            keep = np.where(scores >= self.score_thresh)[0]
            boxes, scores, lvl = boxes[keep], scores[keep], lvl[keep]
            keep = _batched_nms_np(boxes, scores, lvl, self.nms_thresh)
            keep = keep[:self.post_nms_top_n()]
            final_boxes.append(boxes[keep])
            final_scores.append(scores[keep])
        return final_boxes, final_scores

    def __call__(self, sizes, features):
        feats = list(features.values())
        obj_levels, prop_levels, num_anchors_per_level = [], [], []
        for f, scale in zip(feats, self.scales):
            _, _, h, w = f.shape
            anc_t = generate_level_anchors_t(
                (h, w), sizes[0], scale, self.aspect_ratios,
                self.head_params["group"])
            obj, prop = rpn_head_decode_level(f, self.head_params, anc_t)
            obj_levels.append(obj)
            prop_levels.append(prop)
            num_anchors_per_level.append(
                h * w * self.head_params["num_anchors"])
        objectness = jnp.concatenate(obj_levels, axis=1)       # (N, total)
        proposals = jnp.concatenate(prop_levels, axis=1)       # (N, total, 4)
        boxes, _ = self.filter_proposals(proposals, objectness, sizes,
                                         num_anchors_per_level)
        return boxes


def init_head_params(key, in_channels, num_anchors):
    """Random RPNHead weights in PyTorch layout, repacked for the fused
    transposed Pallas kernel (bf16 matmul operands, f32 biases)."""
    c, a = in_channels, num_anchors
    g = _round_up(a, 8)
    k0, k1, k2 = jax.random.split(key, 3)
    w3 = jax.random.normal(k0, (c, c, 3, 3), jnp.float32) * 0.1   # conv 3x3
    wc = jax.random.normal(k1, (a, c), jnp.float32) * 0.1         # cls 1x1
    wb = jax.random.normal(k2, (4 * a, c), jnp.float32) * 0.1     # bbox 1x1
    b3 = jnp.zeros((c,), jnp.float32)
    bc = jnp.zeros((a,), jnp.float32)
    bb = jnp.zeros((4 * a,), jnp.float32)

    # (Cout, Cin, 3, 3) -> (Cout, tap*Cin), taps row-major over (ky, kx).
    w3m = jnp.transpose(w3, (0, 2, 3, 1)).reshape(c, 9 * c)
    # Fused heads with 8-aligned row groups [cls | dx | dy | dw | dh].
    wh = jnp.zeros((5 * g, c), jnp.float32).at[0:a].set(wc)
    bh = jnp.zeros((5 * g,), jnp.float32).at[0:a].set(bc)
    for coord in range(4):
        r0 = (1 + coord) * g
        wh = wh.at[r0:r0 + a].set(wb[coord::4])
        bh = bh.at[r0:r0 + a].set(bb[coord::4])
    return dict(
        num_anchors=a, group=g,
        w3m=w3m.astype(jnp.bfloat16),
        b3=b3.reshape(c, 1),
        wh=wh.astype(jnp.bfloat16),
        bh=bh.reshape(5 * g, 1),
    )


if __name__ == "__main__":
    key = jax.random.PRNGKey(0)
    kf0, kf1, kh = jax.random.split(key, 3)
    N, C = 2, 16
    image_size = (64, 64)
    sizes = [image_size] * N
    # PyTorch-style NCHW feature maps for two pyramid levels.
    features = {
        "0": jax.random.normal(kf0, (N, C, 16, 16), jnp.float32),
        "1": jax.random.normal(kf1, (N, C, 8, 8), jnp.float32),
    }
    aspect_ratios = (0.5, 1.0, 2.0)          # A = 3 anchors / location
    scales = (16.0, 32.0)                    # one anchor size per level

    head_params = init_head_params(kh, C, len(aspect_ratios))
    rpn = RegionProposalNetwork(
        head_params=head_params, scales=scales, aspect_ratios=aspect_ratios,
        pre_nms_top_n={"training": 400, "testing": 200},
        post_nms_top_n={"training": 200, "testing": 100},
        nms_thresh=0.7, score_thresh=0.0)

    # Run the fused Pallas head+decode kernel once explicitly and block.
    h0, w0 = features["0"].shape[2:]
    anc0 = generate_level_anchors_t((h0, w0), image_size, scales[0],
                                    aspect_ratios, head_params["group"])
    obj0, prop0 = rpn_head_decode_level(features["0"], head_params, anc0)
    jax.block_until_ready((obj0, prop0))
    assert obj0.shape == (N, h0 * w0 * len(aspect_ratios))
    assert prop0.shape == (N, h0 * w0 * len(aspect_ratios), 4)

    # Full RPN forward (fused kernel per level + top-k + host NMS filtering).
    boxes = rpn(sizes, features)
    jax.block_until_ready(boxes)
    assert len(boxes) == N and all(b.shape[1] == 4 for b in boxes)
    print("KERNEL_OK")
</pallas_src>

<mosaic_0001>
module attributes {stable_mosaic.version = 11 : i64} {
  func.func @_rpn_head_decode_kernel(%arg0: i32, %arg1: memref<1x16x512xbf16, #tpu.memory_space<vmem>>, %arg2: memref<16x144xbf16, #tpu.memory_space<vmem>>, %arg3: memref<16x1xf32, #tpu.memory_space<vmem>>, %arg4: memref<40x16xbf16, #tpu.memory_space<vmem>>, %arg5: memref<40x1xf32, #tpu.memory_space<vmem>>, %arg6: memref<32x384xf32, #tpu.memory_space<vmem>>, %arg7: memref<1x40x384xf32, #tpu.memory_space<vmem>>) attributes {dimension_semantics = [#tpu.dimension_semantics<parallel>], iteration_bounds = array<i64: 2>, scalar_prefetch = 0 : i64, scratch_operands = 0 : i64, tpu.core_type = #tpu.core_type<tc>, window_params = [{transform_indices = @transform_0, window_bounds = array<i64: 1, 16, 512>}, {pipeline_mode = #tpu.pipeline_mode<synchronous>, transform_indices = @transform_1, window_bounds = array<i64: 16, 144>}, {pipeline_mode = #tpu.pipeline_mode<synchronous>, transform_indices = @transform_2, window_bounds = array<i64: 16, 1>}, {pipeline_mode = #tpu.pipeline_mode<synchronous>, transform_indices = @transform_3, window_bounds = array<i64: 40, 16>}, {pipeline_mode = #tpu.pipeline_mode<synchronous>, transform_indices = @transform_4, window_bounds = array<i64: 40, 1>}, {pipeline_mode = #tpu.pipeline_mode<synchronous>, transform_indices = @transform_5, window_bounds = array<i64: 32, 384>}, {transform_indices = @transform_6, window_bounds = array<i64: 1, 40, 384>}]} {
    %c0 = arith.constant 0 : index
    %c0_0 = arith.constant 0 : index
    %c0_1 = arith.constant 0 : index
    %0 = vector.load %arg1[%c0, %c0_0, %c0_1] : memref<1x16x512xbf16, #tpu.memory_space<vmem>>, vector<1x16x512xbf16>
    %1 = vector.shape_cast %0 : vector<1x16x512xbf16> to vector<16x512xbf16>
    %2 = vector.extract_strided_slice %1 {offsets = [0, 0], sizes = [16, 384], strides = [1, 1]} : vector<16x512xbf16> to vector<16x384xbf16>
    %3 = vector.extract_strided_slice %1 {offsets = [0, 1], sizes = [16, 384], strides = [1, 1]} : vector<16x512xbf16> to vector<16x384xbf16>
    %4 = vector.extract_strided_slice %1 {offsets = [0, 2], sizes = [16, 384], strides = [1, 1]} : vector<16x512xbf16> to vector<16x384xbf16>
    %5 = vector.extract_strided_slice %1 {offsets = [0, 18], sizes = [16, 384], strides = [1, 1]} : vector<16x512xbf16> to vector<16x384xbf16>
    %6 = vector.extract_strided_slice %1 {offsets = [0, 19], sizes = [16, 384], strides = [1, 1]} : vector<16x512xbf16> to vector<16x384xbf16>
    %7 = vector.extract_strided_slice %1 {offsets = [0, 20], sizes = [16, 384], strides = [1, 1]} : vector<16x512xbf16> to vector<16x384xbf16>
    %8 = vector.extract_strided_slice %1 {offsets = [0, 36], sizes = [16, 384], strides = [1, 1]} : vector<16x512xbf16> to vector<16x384xbf16>
    %9 = vector.extract_strided_slice %1 {offsets = [0, 37], sizes = [16, 384], strides = [1, 1]} : vector<16x512xbf16> to vector<16x384xbf16>
    %10 = vector.extract_strided_slice %1 {offsets = [0, 38], sizes = [16, 384], strides = [1, 1]} : vector<16x512xbf16> to vector<16x384xbf16>
    %11 = tpu.concatenate %2, %3, %4, %5, %6, %7, %8, %9, %10 in 0 : vector<16x384xbf16>, vector<16x384xbf16>, vector<16x384xbf16>, vector<16x384xbf16>, vector<16x384xbf16>, vector<16x384xbf16>, vector<16x384xbf16>, vector<16x384xbf16>, vector<16x384xbf16> -> vector<144x384xbf16>
    %c0_2 = arith.constant 0 : index
    %c0_3 = arith.constant 0 : index
    %12 = vector.load %arg2[%c0_2, %c0_3] : memref<16x144xbf16, #tpu.memory_space<vmem>>, vector<16x144xbf16>
    %cst = arith.constant dense<0.000000e+00> : vector<16x384xf32>
    %13 = tpu.matmul %12, %11, %cst {dimension_numbers = #tpu.dot_dimension_numbers<[1], [0], [0], [1], [0, 0, 1, 1], [], []>} : vector<16x144xbf16>, vector<144x384xbf16>, vector<16x384xf32> -> vector<16x384xf32>
    %c0_4 = arith.constant 0 : index
    %c0_5 = arith.constant 0 : index
    %14 = vector.load %arg3[%c0_4, %c0_5] : memref<16x1xf32, #tpu.memory_space<vmem>>, vector<16x1xf32>
    %15 = vector.broadcast %14 : vector<16x1xf32> to vector<16x384xf32>
    %16 = arith.addf %13, %15 : vector<16x384xf32>
    %cst_6 = arith.constant 0.000000e+00 : f32
    %17 = vector.broadcast %cst_6 : f32 to vector<16x384xf32>
    %18 = arith.maximumf %16, %17 : vector<16x384xf32>
    %19 = arith.truncf %18 : vector<16x384xf32> to vector<16x384xbf16>
    %c0_7 = arith.constant 0 : index
    %c0_8 = arith.constant 0 : index
    %20 = vector.load %arg4[%c0_7, %c0_8] : memref<40x16xbf16, #tpu.memory_space<vmem>>, vector<40x16xbf16>
    %cst_9 = arith.constant dense<0.000000e+00> : vector<40x384xf32>
    %21 = tpu.matmul %20, %19, %cst_9 {dimension_numbers = #tpu.dot_dimension_numbers<[1], [0], [0], [1], [0, 0, 1, 1], [], []>} : vector<40x16xbf16>, vector<16x384xbf16>, vector<40x384xf32> -> vector<40x384xf32>
    %c0_10 = arith.constant 0 : index
    %c0_11 = arith.constant 0 : index
    %22 = vector.load %arg5[%c0_10, %c0_11] : memref<40x1xf32, #tpu.memory_space<vmem>>, vector<40x1xf32>
    %23 = vector.broadcast %22 : vector<40x1xf32> to vector<40x384xf32>
    %24 = arith.addf %21, %23 : vector<40x384xf32>
    %25 = vector.extract_strided_slice %24 {offsets = [0, 0], sizes = [8, 384], strides = [1, 1]} : vector<40x384xf32> to vector<8x384xf32>
    %26 = vector.extract_strided_slice %24 {offsets = [8, 0], sizes = [8, 384], strides = [1, 1]} : vector<40x384xf32> to vector<8x384xf32>
    %27 = vector.extract_strided_slice %24 {offsets = [16, 0], sizes = [8, 384], strides = [1, 1]} : vector<40x384xf32> to vector<8x384xf32>
    %28 = vector.extract_strided_slice %24 {offsets = [24, 0], sizes = [8, 384], strides = [1, 1]} : vector<40x384xf32> to vector<8x384xf32>
    %cst_12 = arith.constant 4.13516665 : f32
    %29 = vector.broadcast %cst_12 : f32 to vector<8x384xf32>
    %30 = arith.minimumf %28, %29 : vector<8x384xf32>
    %31 = vector.extract_strided_slice %24 {offsets = [32, 0], sizes = [8, 384], strides = [1, 1]} : vector<40x384xf32> to vector<8x384xf32>
    %cst_13 = arith.constant 4.13516665 : f32
    %32 = vector.broadcast %cst_13 : f32 to vector<8x384xf32>
    %33 = arith.minimumf %31, %32 : vector<8x384xf32>
    %c0_14 = arith.constant 0 : index
    %c0_15 = arith.constant 0 : index
    %34 = vector.load %arg6[%c0_14, %c0_15] : memref<32x384xf32, #tpu.memory_space<vmem>>, vector<32x384xf32>
    %35 = vector.extract_strided_slice %34 {offsets = [0, 0], sizes = [8, 384], strides = [1, 1]} : vector<32x384xf32> to vector<8x384xf32>
    %36 = vector.extract_strided_slice %34 {offsets = [8, 0], sizes = [8, 384], strides = [1, 1]} : vector<32x384xf32> to vector<8x384xf32>
    %37 = vector.extract_strided_slice %34 {offsets = [16, 0], sizes = [8, 384], strides = [1, 1]} : vector<32x384xf32> to vector<8x384xf32>
    %38 = vector.extract_strided_slice %34 {offsets = [24, 0], sizes = [8, 384], strides = [1, 1]} : vector<32x384xf32> to vector<8x384xf32>
    %39 = arith.subf %37, %35 : vector<8x384xf32>
    %40 = arith.subf %38, %36 : vector<8x384xf32>
    %cst_16 = arith.constant 5.000000e-01 : f32
    %41 = vector.broadcast %cst_16 : f32 to vector<8x384xf32>
    %42 = arith.mulf %41, %39 : vector<8x384xf32>
    %43 = arith.addf %35, %42 : vector<8x384xf32>
    %cst_17 = arith.constant 5.000000e-01 : f32
    %44 = vector.broadcast %cst_17 : f32 to vector<8x384xf32>
    %45 = arith.mulf %44, %40 : vector<8x384xf32>
    %46 = arith.addf %36, %45 : vector<8x384xf32>
    %47 = arith.mulf %26, %39 : vector<8x384xf32>
    %48 = arith.addf %47, %43 : vector<8x384xf32>
    %49 = arith.mulf %27, %40 : vector<8x384xf32>
    %50 = arith.addf %49, %46 : vector<8x384xf32>
    %51 = math.exp %30 : vector<8x384xf32>
    %52 = arith.mulf %51, %39 : vector<8x384xf32>
    %53 = math.exp %33 : vector<8x384xf32>
    %54 = arith.mulf %53, %40 : vector<8x384xf32>
    %cst_18 = arith.constant 5.000000e-01 : f32
    %55 = vector.broadcast %cst_18 : f32 to vector<8x384xf32>
    %56 = arith.mulf %55, %52 : vector<8x384xf32>
    %57 = arith.subf %48, %56 : vector<8x384xf32>
    %cst_19 = arith.constant 5.000000e-01 : f32
    %58 = vector.broadcast %cst_19 : f32 to vector<8x384xf32>
    %59 = arith.mulf %58, %54 : vector<8x384xf32>
    %60 = arith.subf %50, %59 : vector<8x384xf32>
    %cst_20 = arith.constant 5.000000e-01 : f32
    %61 = vector.broadcast %cst_20 : f32 to vector<8x384xf32>
    %62 = arith.mulf %61, %52 : vector<8x384xf32>
    %63 = arith.addf %48, %62 : vector<8x384xf32>
    %cst_21 = arith.constant 5.000000e-01 : f32
    %64 = vector.broadcast %cst_21 : f32 to vector<8x384xf32>
    %65 = arith.mulf %64, %54 : vector<8x384xf32>
    %66 = arith.addf %50, %65 : vector<8x384xf32>
    %67 = tpu.concatenate %25, %57, %60, %63, %66 in 0 : vector<8x384xf32>, vector<8x384xf32>, vector<8x384xf32>, vector<8x384xf32>, vector<8x384xf32> -> vector<40x384xf32>
    %c0_22 = arith.constant 0 : index
    %c0_23 = arith.constant 0 : index
    %c0_24 = arith.constant 0 : index
    %68 = vector.load %arg7[%c0_22, %c0_23, %c0_24] : memref<1x40x384xf32, #tpu.memory_space<vmem>>, vector<1x40x384xf32>
    %69 = vector.shape_cast %68 : vector<1x40x384xf32> to vector<40x384xf32>
    %70 = vector.shape_cast %67 : vector<40x384xf32> to vector<1x40x384xf32>
    tpu.vector_store %arg7[%c0_22, %c0_23, %c0_24], %70 {strides = array<i32>} : memref<1x40x384xf32, #tpu.memory_space<vmem>>, vector<1x40x384xf32>,
    return
  }
  func.func @transform_0(%arg0: i32) -> (i32, i32, i32) {
    %c0_i32 = arith.constant 0 : i32
    %c0_i32_0 = arith.constant 0 : i32
    %c0_i32_1 = arith.constant 0 : i32
    return %arg0, %c0_i32, %c0_i32_0 : i32, i32, i32
  }
  func.func @transform_1(%arg0: i32) -> (i32, i32) {
    %c0_i32 = arith.constant 0 : i32
    %c0_i32_0 = arith.constant 0 : i32
    %c0_i32_1 = arith.constant 0 : i32
    return %c0_i32, %c0_i32_0 : i32, i32
  }
  func.func @transform_2(%arg0: i32) -> (i32, i32) {
    %c0_i32 = arith.constant 0 : i32
    %c0_i32_0 = arith.constant 0 : i32
    %c0_i32_1 = arith.constant 0 : i32
    return %c0_i32, %c0_i32_0 : i32, i32
  }
  func.func @transform_3(%arg0: i32) -> (i32, i32) {
    %c0_i32 = arith.constant 0 : i32
    %c0_i32_0 = arith.constant 0 : i32
    %c0_i32_1 = arith.constant 0 : i32
    return %c0_i32, %c0_i32_0 : i32, i32
  }
  func.func @transform_4(%arg0: i32) -> (i32, i32) {
    %c0_i32 = arith.constant 0 : i32
    %c0_i32_0 = arith.constant 0 : i32
    %c0_i32_1 = arith.constant 0 : i32
    return %c0_i32, %c0_i32_0 : i32, i32
  }
  func.func @transform_5(%arg0: i32) -> (i32, i32) {
    %c0_i32 = arith.constant 0 : i32
    %c0_i32_0 = arith.constant 0 : i32
    %c0_i32_1 = arith.constant 0 : i32
    return %c0_i32, %c0_i32_0 : i32, i32
  }
  func.func @transform_6(%arg0: i32) -> (i32, i32, i32) {
    %c0_i32 = arith.constant 0 : i32
    %c0_i32_0 = arith.constant 0 : i32
    %c0_i32_1 = arith.constant 0 : i32
    return %arg0, %c0_i32, %c0_i32_0 : i32, i32, i32
  }
}

</mosaic_0001>

<llo_original>
// kernel: tpu_custom_call.1
$region0: #{tpu_custom_call.1}
  #allocation0 [shape = 'u32[]', space=smem, size = 0x4, offset = 0x4, fixed_abs, tag = 'smem constant byte address 0x4 - core index']
  #allocation1 [shape = 'u32[144,128]{1,0:T(1,128)}', space=vmem, size = 0x12000, scoped, tag = 'internal scratch']
  %s0 = inlined_call_operand.hbm [shape: bf16[2,16,512], index: 0, kind: input, shape index: {}]
  %s1 = inlined_call_operand.hbm [shape: bf16[16,144], index: 1, kind: input, shape index: {}]
  %s2 = inlined_call_operand.vmem [shape: f32[16,1], index: 2, kind: input, shape index: {}]
  %s3 = inlined_call_operand.vmem [shape: bf16[40,16], index: 3, kind: input, shape index: {}]
  %s4 = inlined_call_operand.vmem [shape: f32[40,1], index: 4, kind: input, shape index: {}]
  %s5 = inlined_call_operand.vmem [shape: f32[32,384], index: 5, kind: input, shape index: {}]
  %s6 = inlined_call_operand.hbm [shape: f32[2,40,384], index: 6, kind: output, shape index: {}]
  %s7 = sld [smem:[#allocation0]]
  $region65: #{tpu_custom_call.1} parent=0
    _
  %s9 = ssub.s32 1, %s7
  %s10 = scalar_select 0, %s9, %s7
  $region1: #{tpu_custom_call.1} parent=0
    #allocation2 [shape = 'u8[32768]{0}', space=vmem, size = 0x8000, scoped, tag = 'input window, operand 0']
    #allocation3 [shape = 's32[2]{0}', space=sflag, size = 0x8, scoped, tag = 'scoped memory for tpu_custom_call.1']
    #allocation4 [shape = 's32[2]{0}', space=sflag, size = 0x8, scoped, tag = 'scoped memory for tpu_custom_call.1']
    #allocation5 [shape = 'u8[8192]{0}', space=vmem, size = 0x2000, scoped, tag = 'input window, operand 1, single buffered']
    #allocation6 [shape = 's32[1]{0}', space=sflag, size = 0x4, scoped, tag = 'scoped memory for tpu_custom_call.1']
    #allocation7 [shape = 'u8[122880]{0}', space=vmem, size = 0x1e000, scoped, tag = 'output window, operand 0']
    %11 = vsyncpa [#allocation3], 0
    %s12 = scalar_lea.sflag [#allocation3], 1
    %13 = vsyncpa %s12, 0
    %14 = vsyncpa [#allocation6], 0
    %15 = vsyncpa [#allocation4], 0
    %s16 = scalar_lea.sflag [#allocation4], 1
    %17 = vsyncpa %s16, 0
    loop: start=0, step=1, limit=4
    $region2: #{tpu_custom_call.1} parent=1 // loop_pre_header
      _
    $region3: #{tpu_custom_call.1} parent=1 // loop_header
      %s19 = sphi 0, %s23
      %p20 = scmp.ge.s32.totalorder %s19, 4
      %s29 = sphi 0, %s31
      %s32 = sphi 0, %s29
      %s33 = sphi 0, %s32
      %s49 = sphi 0, %s33
      %s53 = sphi 0, %s53
      %s55 = sphi 0, %s53
      %s56 = sphi 0, %s55
      %s70 = sphi 0, %s56
      %s74 = sphi 0, %s74
      %s76 = sphi 0, %s74
      %s77 = sphi 0, %s76
      %s91 = sphi 0, %s77
      %s95 = sphi 0, %s95
      %s97 = sphi 0, %s95
      %s98 = sphi 0, %s97
      %s112 = sphi 0, %s98
      %s116 = sphi 0, %s116
      %s118 = sphi 0, %s116
      %s119 = sphi 0, %s118
      %s133 = sphi 0, %s119
      %s137 = sphi 0, %s137
      %s139 = sphi 0, %s137
      %s140 = sphi 0, %s139
      %s154 = sphi 0, %s140
      %s160 = sphi 0, %s162
      %s163 = sphi 0, %s160
      %s164 = sphi 0, %s163
      %s180 = sphi 0, %s164
    $region4: #{tpu_custom_call.1} parent=1 // loop_header_branch
      %22 = sbr.rel (%p20) target = $region8
    $region5: #{tpu_custom_call.1} parent=1 // loop_body
      %s24 = ssub.s32 %s19, 1
      %s25 = ssub.s32 %s19, 2
      %s26 = sadd.s32 %s19, 1
      %s27 = ssub.s32 %s19, %s26
      %p28 = scmp.eq.s32.totalorder %s27, 0
      %s30 = sadd.s32 %s29, 1
      %s31 = scalar_select %p28, %s29, %s30
      %p34 = pneg %p28
      %p35 = scmp.eq.s32.totalorder %s19, 1
      %p36 = por %p34, %p35
      %p37 = scmp.ne.s32.totalorder %s29, %s32
      %p38 = scmp.eq.s32.totalorder %s19, 0
      %p39 = por %p37, %p38
      %p40 = scmp.ne.s32.totalorder %s29, %s32
      %p41 = scmp.eq.s32.totalorder %s24, 1
      %p42 = por %p40, %p41
      %p43 = scmp.ne.s32.totalorder %s32, %s33
      %p44 = scmp.eq.s32.totalorder %s24, 0
      %p45 = por %p43, %p44
      %p46 = scmp.ne.s32.totalorder %s32, %s33
      %p47 = scmp.eq.s32.totalorder %s25, 1
      %p48 = por %p46, %p47
      %p50 = scmp.ne.s32.totalorder %s33, %s49
      %p51 = scmp.eq.s32.totalorder %s25, 0
      %p52 = por %p50, %p51
      %s54 = sadd.s32 %s53, 1
      %p57 = scmp.eq.s32.totalorder %s19, 1
      %p58 = scmp.ne.s32.totalorder %s53, %s55
      %p59 = scmp.eq.s32.totalorder %s19, 0
      %p60 = por %p58, %p59
      %p61 = scmp.ne.s32.totalorder %s53, %s55
      %p62 = scmp.eq.s32.totalorder %s24, 1
      %p63 = por %p61, %p62
      %p64 = scmp.ne.s32.totalorder %s55, %s56
      %p65 = scmp.eq.s32.totalorder %s24, 0
      %p66 = por %p64, %p65
      %p67 = scmp.ne.s32.totalorder %s55, %s56
      %p68 = scmp.eq.s32.totalorder %s25, 1
      %p69 = por %p67, %p68
      %p71 = scmp.ne.s32.totalorder %s56, %s70
      %p72 = scmp.eq.s32.totalorder %s25, 0
      %p73 = por %p71, %p72
      %s75 = sadd.s32 %s74, 1
      %p78 = scmp.eq.s32.totalorder %s19, 1
      %p79 = scmp.ne.s32.totalorder %s74, %s76
      %p80 = scmp.eq.s32.totalorder %s19, 0
      %p81 = por %p79, %p80
      %p82 = scmp.ne.s32.totalorder %s74, %s76
      %p83 = scmp.eq.s32.totalorder %s24, 1
      %p84 = por %p82, %p83
      %p85 = scmp.ne.s32.totalorder %s76, %s77
      %p86 = scmp.eq.s32.totalorder %s24, 0
      %p87 = por %p85, %p86
      %p88 = scmp.ne.s32.totalorder %s76, %s77
      %p89 = scmp.eq.s32.totalorder %s25, 1
      %p90 = por %p88, %p89
      %p92 = scmp.ne.s32.totalorder %s77, %s91
      %p93 = scmp.eq.s32.totalorder %s25, 0
      %p94 = por %p92, %p93
      %s96 = sadd.s32 %s95, 1
      %p99 = scmp.eq.s32.totalorder %s19, 1
      %p100 = scmp.ne.s32.totalorder %s95, %s97
      %p101 = scmp.eq.s32.totalorder %s19, 0
      %p102 = por %p100, %p101
      %p103 = scmp.ne.s32.totalorder %s95, %s97
      %p104 = scmp.eq.s32.totalorder %s24, 1
      %p105 = por %p103, %p104
      %p106 = scmp.ne.s32.totalorder %s97, %s98
      %p107 = scmp.eq.s32.totalorder %s24, 0
      %p108 = por %p106, %p107
      %p109 = scmp.ne.s32.totalorder %s97, %s98
      %p110 = scmp.eq.s32.totalorder %s25, 1
      %p111 = por %p109, %p110
      %p113 = scmp.ne.s32.totalorder %s98, %s112
      %p114 = scmp.eq.s32.totalorder %s25, 0
      %p115 = por %p113, %p114
      %s117 = sadd.s32 %s116, 1
      %p120 = scmp.eq.s32.totalorder %s19, 1
      %p121 = scmp.ne.s32.totalorder %s116, %s118
      %p122 = scmp.eq.s32.totalorder %s19, 0
      %p123 = por %p121, %p122
      %p124 = scmp.ne.s32.totalorder %s116, %s118
      %p125 = scmp.eq.s32.totalorder %s24, 1
      %p126 = por %p124, %p125
      %p127 = scmp.ne.s32.totalorder %s118, %s119
      %p128 = scmp.eq.s32.totalorder %s24, 0
      %p129 = por %p127, %p128
      %p130 = scmp.ne.s32.totalorder %s118, %s119
      %p131 = scmp.eq.s32.totalorder %s25, 1
      %p132 = por %p130, %p131
      %p134 = scmp.ne.s32.totalorder %s119, %s133
      %p135 = scmp.eq.s32.totalorder %s25, 0
      %p136 = por %p134, %p135
      %s138 = sadd.s32 %s137, 1
      %p141 = scmp.eq.s32.totalorder %s19, 1
      %p142 = scmp.ne.s32.totalorder %s137, %s139
      %p143 = scmp.eq.s32.totalorder %s19, 0
      %p144 = por %p142, %p143
      %p145 = scmp.ne.s32.totalorder %s137, %s139
      %p146 = scmp.eq.s32.totalorder %s24, 1
      %p147 = por %p145, %p146
      %p148 = scmp.ne.s32.totalorder %s139, %s140
      %p149 = scmp.eq.s32.totalorder %s24, 0
      %p150 = por %p148, %p149
      %p151 = scmp.ne.s32.totalorder %s139, %s140
      %p152 = scmp.eq.s32.totalorder %s25, 1
      %p153 = por %p151, %p152
      %p155 = scmp.ne.s32.totalorder %s140, %s154
      %p156 = scmp.eq.s32.totalorder %s25, 0
      %p157 = por %p155, %p156
      %s158 = ssub.s32 %s19, %s26
      %p159 = scmp.eq.s32.totalorder %s158, 0
      %s161 = sadd.s32 %s160, 1
      %s162 = scalar_select %p159, %s160, %s161
      %p165 = pneg %p159
      %p166 = scmp.eq.s32.totalorder %s19, 1
      %p167 = por %p165, %p166
      %p168 = scmp.ne.s32.totalorder %s160, %s163
      %p169 = scmp.eq.s32.totalorder %s19, 0
      %p170 = por %p168, %p169
      %p171 = scmp.ne.s32.totalorder %s160, %s163
      %p172 = scmp.eq.s32.totalorder %s24, 1
      %p173 = por %p171, %p172
      %p174 = scmp.ne.s32.totalorder %s163, %s164
      %p175 = scmp.eq.s32.totalorder %s24, 0
      %p176 = por %p174, %p175
      %p177 = scmp.ne.s32.totalorder %s163, %s164
      %p178 = scmp.eq.s32.totalorder %s25, 1
      %p179 = por %p177, %p178
      %p181 = scmp.ne.s32.totalorder %s164, %s180
      %p182 = scmp.eq.s32.totalorder %s25, 0
      %p183 = por %p181, %p182
      %p184 = scmp.le.s32.totalorder 1, %s19
      %p185 = scmp.lt.s32.totalorder %s19, 3
      %p186 = pnand %p184, %p185
      %p187 = pneg %p186
      // Predicated region
      $region9: #{tpu_custom_call.1} parent=5 // pred_check
        _
      $region10: #{tpu_custom_call.1} parent=5 // pred_check_branch
        %189 = sbr.rel (%p186) target = $region12
      $region11: #{tpu_custom_call.1} parent=5 // pred_region
        %s190 = ssub.s32 %s19, 1
        // Predicated region
        $region13: #{tpu_custom_call.1} parent=11 // pred_check
          %p191 = pneg %p66
        $region14: #{tpu_custom_call.1} parent=11 // pred_check_branch
          %193 = sbr.rel (%p191) target = $region16
        $region15: #{tpu_custom_call.1} parent=11 // pred_region
          %s195 = ssub.s32 256, 256
          %196 = vsyncadd [#allocation6], %s195
          %s197 = sshll.u32 [#allocation5], 4
          %s198 = int_to_ptr.vmem [resolvable:$true] %s197
          %203 = dma.hbm_to_vmem [thread:$0]  %s1, 256, %s198, [#allocation6], 128, 128, 8
        $region16: #{tpu_custom_call.1} parent=11 // pred_fallthru
          _
        // Predicated region
        $region17: #{tpu_custom_call.1} parent=11 // pred_check
          %p204 = pneg %p87
        $region18: #{tpu_custom_call.1} parent=11 // pred_check_branch
          %206 = sbr.rel (%p204) target = $region20
        $region19: #{tpu_custom_call.1} parent=11 // pred_region
          _
        $region20: #{tpu_custom_call.1} parent=11 // pred_fallthru
          _
        // Predicated region
        $region21: #{tpu_custom_call.1} parent=11 // pred_check
          %p207 = pneg %p108
        $region22: #{tpu_custom_call.1} parent=11 // pred_check_branch
          %209 = sbr.rel (%p207) target = $region24
        $region23: #{tpu_custom_call.1} parent=11 // pred_region
          _
        $region24: #{tpu_custom_call.1} parent=11 // pred_fallthru
          _
        // Predicated region
        $region25: #{tpu_custom_call.1} parent=11 // pred_check
          %p210 = pneg %p129
        $region26: #{tpu_custom_call.1} parent=11 // pred_check_branch
          %212 = sbr.rel (%p210) target = $region28
        $region27: #{tpu_custom_call.1} parent=11 // pred_region
          _
        $region28: #{tpu_custom_call.1} parent=11 // pred_fallthru
          _
        // Predicated region
        $region29: #{tpu_custom_call.1} parent=11 // pred_check
          %p213 = pneg %p150
        $region30: #{tpu_custom_call.1} parent=11 // pred_check_branch
          %215 = sbr.rel (%p213) target = $region32
        $region31: #{tpu_custom_call.1} parent=11 // pred_region
          _
        $region32: #{tpu_custom_call.1} parent=11 // pred_fallthru
          _
      $region12: #{tpu_custom_call.1} parent=5 // pred_fallthru
        _
      %p216 = scmp.lt.s32.totalorder %s19, 2
      // Predicated region
      $region33: #{tpu_custom_call.1} parent=5 // pred_check
        %p217 = pneg %p216
      $region34: #{tpu_custom_call.1} parent=5 // pred_check_branch
        %219 = sbr.rel (%p217) target = $region36
      $region35: #{tpu_custom_call.1} parent=5 // pred_region
        // Predicated region
        $region37: #{tpu_custom_call.1} parent=35 // pred_check
          %p220 = pneg %p39
        $region38: #{tpu_custom_call.1} parent=35 // pred_check_branch
          %222 = sbr.rel (%p220) target = $region40
        $region39: #{tpu_custom_call.1} parent=35 // pred_region
          %s223 = sand.u32 %s29, 1
          %s224 = scalar_lea.sflag [#allocation3], %s223
          %s225 = sand.u32 %s29, 1
          %s226 = smul.addr %s225, 32
          %s227 = scalar_lea.vmem [#allocation2], %s226
          %s229 = ssub.s32 512, 512
          %230 = vsyncadd %s224, %s229
          %s231 = smul.addr %s19, 8
          %s232 = smul.addr %s231, 64
          %s233 = scalar_lea.hbm %s0, %s232
          %s234 = sshll.u32 %s227, 4
          %s235 = int_to_ptr.vmem [resolvable:$true] %s234
          %240 = dma.hbm_to_vmem [thread:$0]  %s233, 512, %s235, %s224, 256, 256, 16
        $region40: #{tpu_custom_call.1} parent=35 // pred_fallthru
          _
      $region36: #{tpu_custom_call.1} parent=5 // pred_fallthru
        _
      %p241 = scmp.le.s32.totalorder 1, %s19
      %p242 = scmp.lt.s32.totalorder %s19, 3
      %p243 = pnand %p241, %p242
      %p244 = pneg %p243
      // Predicated region
      $region41: #{tpu_custom_call.1} parent=5 // pred_check
        _
      $region42: #{tpu_custom_call.1} parent=5 // pred_check_branch
        %246 = sbr.rel (%p243) target = $region44
      $region43: #{tpu_custom_call.1} parent=5 // pred_region
        %s247 = ssub.s32 %s19, 1
        %s248 = sand.u32 %s32, 1
        %s249 = scalar_lea.sflag [#allocation3], %s248
        %s250 = sand.u32 %s32, 1
        %s251 = smul.addr %s250, 32
        %s252 = scalar_lea.vmem [#allocation2], %s251
        // Predicated region
        $region45: #{tpu_custom_call.1} parent=43 // pred_check
          %p253 = pneg %p45
        $region46: #{tpu_custom_call.1} parent=43 // pred_check_branch
          %255 = sbr.rel (%p253) target = $region48
        $region47: #{tpu_custom_call.1} parent=43 // pred_region
          %256 = dma.done %s249, 512
        $region48: #{tpu_custom_call.1} parent=43 // pred_fallthru
          _
        // Predicated region
        $region49: #{tpu_custom_call.1} parent=43 // pred_check
          %p257 = pneg %p66
        $region50: #{tpu_custom_call.1} parent=43 // pred_check_branch
          %259 = sbr.rel (%p257) target = $region52
        $region51: #{tpu_custom_call.1} parent=43 // pred_region
          %260 = dma.done [#allocation6], 256
        $region52: #{tpu_custom_call.1} parent=43 // pred_fallthru
          _
        %s261 = sand.u32 %s32, 1
        %s262 = scalar_lea.sflag [#allocation3], %s261
        %s263 = sand.u32 %s32, 1
        %s264 = smul.addr %s263, 32
        %s265 = scalar_lea.vmem [#allocation2], %s264
        %p266 = pneg %p45
        %p267 = pneg %p42
        %p268 = pneg %p66
        %p269 = pneg %p63
        %p270 = pneg %p87
        %p271 = pneg %p84
        %p272 = pneg %p108
        %p273 = pneg %p105
        %p274 = pneg %p129
        %p275 = pneg %p126
        %p276 = pneg %p150
        %p277 = pneg %p147
        %p278 = pneg %p176
        %p279 = pneg %p173
        %s280 = sand.u32 %s163, 1
        %s281 = scalar_lea.sflag [#allocation4], %s280
        %s282 = sand.u32 %s163, 1
        %s283 = smul.addr %s282, 120
        %s284 = scalar_lea.vmem [#allocation7], %s283
        %v286 = vld [vmem:[%s252] sm:$0xff]
        %v287 = vld [vmem:[%s252 + $0x8] sm:$0xff]
        %v288 = vld [vmem:[%s252 + $0x10] sm:$0xff]
        %v289 = vld [vmem:[%s252 + $0x18] sm:$0xff]
        %v294 = vunpack.c.l.b16 %v286
        %v295 = vunpack.c.h.b16 %v286
        %v296 = vunpack.c.l.b16 %v287
        %v297 = vunpack.c.l.b16 %v288
        %v298 = vunpack.c.h.b16 %v288
        %v299 = vunpack.c.l.b16 %v289
        %v300 = vpack.c.b16 %v297, %v294
        %v301 = vpack.c.b16 %v298, %v295
        %v302 = vpack.c.b16 %v299, %v296
        %v306 = vunpack.c.h.b16 %v287
        %v307 = vunpack.c.h.b16 %v289
        %v308 = vpack.c.b16 %v307, %v306
        %309 = vrot.lane.b32.xlu0 %v300, 127
        %v310 = vpop.permute.xlu0 %309
        %311 = vrot.lane.b32.xlu0 %v301, 127
        %v312 = vpop.permute.xlu0 %311
        %313 = vrot.lane.b32.xlu0 %v302, 127
        %v314 = vpop.permute.xlu0 %313
        %315 = vrot.lane.b32.xlu0 %v308, 127
        %v316 = vpop.permute.xlu0 %315
        %vm317 = vcmask 1039360
        %v318 = vsel %vm317, %v310, %v312
        %v319 = vsel %vm317, %v312, %v314
        %v320 = vsel %vm317, %v314, %v316
        %324 = vrot.lane.b32.xlu0 %v300, 126
        %v325 = vpop.permute.xlu0 %324
        %326 = vrot.lane.b32.xlu0 %v301, 126
        %v327 = vpop.permute.xlu0 %326
        %328 = vrot.lane.b32.xlu0 %v302, 126
        %v329 = vpop.permute.xlu0 %328
        %330 = vrot.lane.b32.xlu0 %v308, 126
        %v331 = vpop.permute.xlu0 %330
        %vm332 = vcmask 1031168
        %v333 = vsel %vm332, %v325, %v327
        %v334 = vsel %vm332, %v327, %v329
        %v335 = vsel %vm332, %v329, %v331
        %339 = vrot.lane.b32.xlu0 %v300, 110
        %v340 = vpop.permute.xlu0 %339
        %341 = vrot.lane.b32.xlu0 %v301, 110
        %v342 = vpop.permute.xlu0 %341
        %343 = vrot.lane.b32.xlu0 %v302, 110
        %v344 = vpop.permute.xlu0 %343
        %345 = vrot.lane.b32.xlu0 %v308, 110
        %v346 = vpop.permute.xlu0 %345
        %vm347 = vcmask 900096
        %v348 = vsel %vm347, %v340, %v342
        %v349 = vsel %vm347, %v342, %v344
        %v350 = vsel %vm347, %v344, %v346
        %354 = vrot.lane.b32.xlu0 %v300, 109
        %v355 = vpop.permute.xlu0 %354
        %356 = vrot.lane.b32.xlu0 %v301, 109
        %v357 = vpop.permute.xlu0 %356
        %358 = vrot.lane.b32.xlu0 %v302, 109
        %v359 = vpop.permute.xlu0 %358
        %360 = vrot.lane.b32.xlu0 %v308, 109
        %v361 = vpop.permute.xlu0 %360
        %vm362 = vcmask 891904
        %v363 = vsel %vm362, %v355, %v357
        %v364 = vsel %vm362, %v357, %v359
        %v365 = vsel %vm362, %v359, %v361
        %369 = vrot.lane.b32.xlu0 %v300, 108
        %v370 = vpop.permute.xlu0 %369
        %371 = vrot.lane.b32.xlu0 %v301, 108
        %v372 = vpop.permute.xlu0 %371
        %373 = vrot.lane.b32.xlu0 %v302, 108
        %v374 = vpop.permute.xlu0 %373
        %375 = vrot.lane.b32.xlu0 %v308, 108
        %v376 = vpop.permute.xlu0 %375
        %vm377 = vcmask 883712
        %v378 = vsel %vm377, %v370, %v372
        %v379 = vsel %vm377, %v372, %v374
        %v380 = vsel %vm377, %v374, %v376
        %384 = vrot.lane.b32.xlu0 %v300, 92
        %v385 = vpop.permute.xlu0 %384
        %386 = vrot.lane.b32.xlu0 %v301, 92
        %v387 = vpop.permute.xlu0 %386
        %388 = vrot.lane.b32.xlu0 %v302, 92
        %v389 = vpop.permute.xlu0 %388
        %390 = vrot.lane.b32.xlu0 %v308, 92
        %v391 = vpop.permute.xlu0 %390
        %vm392 = vcmask 752640
        %v393 = vsel %vm392, %v385, %v387
        %v394 = vsel %vm392, %v387, %v389
        %v395 = vsel %vm392, %v389, %v391
        %399 = vrot.lane.b32.xlu0 %v300, 91
        %v400 = vpop.permute.xlu0 %399
        %401 = vrot.lane.b32.xlu0 %v301, 91
        %v402 = vpop.permute.xlu0 %401
        %403 = vrot.lane.b32.xlu0 %v302, 91
        %v404 = vpop.permute.xlu0 %403
        %405 = vrot.lane.b32.xlu0 %v308, 91
        %v406 = vpop.permute.xlu0 %405
        %vm407 = vcmask 744448
        %v408 = vsel %vm407, %v400, %v402
        %v409 = vsel %vm407, %v402, %v404
        %v410 = vsel %vm407, %v404, %v406
        %414 = vrot.lane.b32.xlu0 %v300, 90
        %v415 = vpop.permute.xlu0 %414
        %416 = vrot.lane.b32.xlu0 %v301, 90
        %v417 = vpop.permute.xlu0 %416
        %418 = vrot.lane.b32.xlu0 %v302, 90
        %v419 = vpop.permute.xlu0 %418
        %420 = vrot.lane.b32.xlu0 %v308, 90
        %v421 = vpop.permute.xlu0 %420
        %vm422 = vcmask 736256
        %v423 = vsel %vm422, %v415, %v417
        %v424 = vsel %vm422, %v417, %v419
        %v425 = vsel %vm422, %v419, %v421
        %v429 = vld [vmem:[#allocation5] sm:$0xff]
        %v430 = vld [vmem:[#allocation5 + $0x8] sm:$0xff]
        %v431 = vld [vmem:[%s2] sm:$0xff]
        %v432 = vld [vmem:[%s2 + $0x8] sm:$0xff]
        %434 = vset.pattern.permute.xlu0 0
        %435 = vperm.xlu0 %434, %v431
        %v436 = vpop.permute.xlu0 %435
        %439 = vset.pattern.permute.xlu0 0
        %440 = vperm.xlu0 %439, %v432
        %v441 = vpop.permute.xlu0 %440
        %v445 = vunpack.c.l.b16 %v429
        %v446 = vunpack.c.h.b16 %v429
        %v447 = vunpack.c.l.b16 %v430
        %v448 = vunpack.c.h.b16 %v430
        %v449 = vpack.c.b16 %v447, %v445
        %v450 = vpack.c.b16 %v448, %v446
        %vm452 = vcmask 130048
        %v454 = vsel %vm452, %v450, 0
        %456 = vmatprep.subr.bf16.mxu0 %v301
        %457 = vmatpush1.bf16.msra.mxu0 %v300
        %458 = vmatprep.subr.bf16.mxu0 %v319
        %459 = vmatpush1.bf16.msra.mxu0 %v318
        %460 = vmatprep.subr.bf16.mxu0 %v334
        %461 = vmatpush1.bf16.msra.mxu0 %v333
        %462 = vmatprep.subr.bf16.mxu0 %v349
        %463 = vmatpush1.bf16.msra.mxu0 %v348
        %464 = vmatprep.subr.bf16.mxu0 %v364
        %465 = vmatpush1.bf16.msra.mxu0 %v363
        %466 = vmatprep.subr.bf16.mxu0 %v379
        %467 = vmatpush1.bf16.msra.mxu0 %v378
        %468 = vmatprep.subr.bf16.mxu0 %v394
        %469 = vmatpush1.bf16.msra.mxu0 %v393
        %470 = vmatprep.subr.bf16.mxu0 %v409
        %471 = vmatpush1.bf16.msra.mxu0 %v408
        %472 = vmatprep.subr.bf16.mxu0 %v424
        %473 = vmatpush1.bf16.msra.mxu0 %v423
        %474 = vmatprep.subr.bf16.mxu0 0
        %475 = vmatpush1.bf16.msra.mxu0 0
        %476 = vmatprep.subr.bf16.mxu0 0
        %477 = vmatpush1.bf16.msra.mxu0 0
        %478 = vmatprep.subr.bf16.mxu0 0
        %479 = vmatpush1.bf16.msra.mxu0 0
        %480 = vmatprep.subr.bf16.mxu0 0
        %481 = vmatpush1.bf16.msra.mxu0 0
        %482 = vmatprep.subr.bf16.mxu0 0
        %483 = vmatpush1.bf16.msra.mxu0 0
        %484 = vmatprep.subr.bf16.mxu0 0
        %485 = vmatpush1.bf16.msra.mxu0 0
        %486 = vmatprep.subr.bf16.mxu0 0
        %487 = vmatpush1.bf16.msra.mxu0 0
        %488 = vmatprep.mubr.bf16.mxu0 %v454
        %489 = vmatmul.mubr.bf16.gmra.mrb[0].mxu0 %v449
        %v490 = vpop.f32.mrb[0].mxu0
        %v491 = vadd.f32 %v436, %v490
        %v492 = vpop.f32.mrb[0].mxu0
        %v493 = vadd.f32 %v436, %v492
        %v494 = vpop.f32.mrb[0].mxu0
        %v495 = vadd.f32 %v441, %v494
        %v496 = vpop.f32.mrb[0].mxu0
        %v497 = vadd.f32 %v441, %v496
        %498 = vdwg.mxu0
        %499 = vmatprep.subr.bf16.mxu0 0
        %500 = vmatpush1.bf16.msra.mxu0 %v302
        %501 = vmatprep.subr.bf16.mxu0 0
        %502 = vmatpush1.bf16.msra.mxu0 %v320
        %503 = vmatprep.subr.bf16.mxu0 0
        %504 = vmatpush1.bf16.msra.mxu0 %v335
        %505 = vmatprep.subr.bf16.mxu0 0
        %506 = vmatpush1.bf16.msra.mxu0 %v350
        %507 = vmatprep.subr.bf16.mxu0 0
        %508 = vmatpush1.bf16.msra.mxu0 %v365
        %509 = vmatprep.subr.bf16.mxu0 0
        %510 = vmatpush1.bf16.msra.mxu0 %v380
        %511 = vmatprep.subr.bf16.mxu0 0
        %512 = vmatpush1.bf16.msra.mxu0 %v395
        %513 = vmatprep.subr.bf16.mxu0 0
        %514 = vmatpush1.bf16.msra.mxu0 %v410
        %515 = vmatprep.subr.bf16.mxu0 0
        %516 = vmatpush1.bf16.msra.mxu0 %v425
        %517 = vmatprep.subr.bf16.mxu0 0
        %518 = vmatpush1.bf16.msra.mxu0 0
        %519 = vmatprep.subr.bf16.mxu0 0
        %520 = vmatpush1.bf16.msra.mxu0 0
        %521 = vmatprep.subr.bf16.mxu0 0
        %522 = vmatpush1.bf16.msra.mxu0 0
        %523 = vmatprep.subr.bf16.mxu0 0
        %524 = vmatpush1.bf16.msra.mxu0 0
        %525 = vmatprep.subr.bf16.mxu0 0
        %526 = vmatpush1.bf16.msra.mxu0 0
        %527 = vmatprep.subr.bf16.mxu0 0
        %528 = vmatpush1.bf16.msra.mxu0 0
        %529 = vmatprep.subr.bf16.mxu0 0
        %530 = vmatpush1.bf16.msra.mxu0 0
        %531 = vmatprep.mubr.bf16.mxu0 %v454
        %532 = vmatmul.mubr.bf16.gmra.mrb[0].mxu0 %v449
        %v533 = vpop.f32.mrb[0].mxu0
        %v534 = vadd.f32 %v436, %v533
        %v535 = vpop.f32.mrb[0].mxu0
        %v536 = vpop.f32.mrb[0].mxu0
        %v537 = vadd.f32 %v441, %v536
        %v538 = vpop.f32.mrb[0].mxu0
        %539 = vdwg.mxu0
        %v540 = vmax.f32 %v491, 0.0
        %v541 = vmax.f32 %v493, 0.0
        %v542 = vmax.f32 %v534, 0.0
        %v543 = vmax.f32 %v495, 0.0
        %v544 = vmax.f32 %v497, 0.0
        %v545 = vmax.f32 %v537, 0.0
        %v546 = vpack.c.bf16 %v543, %v540
        %v547 = vpack.c.bf16 %v544, %v541
        %v548 = vpack.c.bf16 %v545, %v542
        %v549 = vld [vmem:[%s3] sm:$0xf]
        %v550 = vld [vmem:[%s3 + $0x4] sm:$0xf]
        %v551 = vld [vmem:[%s3 + $0x8] sm:$0xf]
        %v552 = vld [vmem:[%s3 + $0xc] sm:$0xf]
        %v553 = vld [vmem:[%s3 + $0x10] sm:$0xf]
        %v554 = vld [vmem:[%s4] sm:$0xff]
        %v555 = vld [vmem:[%s4 + $0x8] sm:$0xff]
        %v556 = vld [vmem:[%s4 + $0x10] sm:$0xff]
        %v557 = vld [vmem:[%s4 + $0x18] sm:$0xff]
        %v558 = vld [vmem:[%s4 + $0x20] sm:$0xff]
        %560 = vset.pattern.permute.xlu0 0
        %561 = vperm.xlu0 %560, %v554
        %v562 = vpop.permute.xlu0 %561
        %565 = vset.pattern.permute.xlu0 0
        %566 = vperm.xlu0 %565, %v555
        %v567 = vpop.permute.xlu0 %566
        %570 = vset.pattern.permute.xlu0 0
        %571 = vperm.xlu0 %570, %v556
        %v572 = vpop.permute.xlu0 %571
        %575 = vset.pattern.permute.xlu0 0
        %576 = vperm.xlu0 %575, %v557
        %v577 = vpop.permute.xlu0 %576
        %580 = vset.pattern.permute.xlu0 0
        %581 = vperm.xlu0 %580, %v558
        %v582 = vpop.permute.xlu0 %581
        %v589 = vunpack.c.l.b16 %v549
        %v590 = vunpack.c.l.b16 %v550
        %v591 = vunpack.c.l.b16 %v551
        %v592 = vunpack.c.l.b16 %v552
        %v593 = vunpack.c.l.b16 %v553
        %v594 = vpack.c.b16 %v590, %v589
        %v595 = vpack.c.b16 %v592, %v591
        %v596 = vpack.c.b16 %v593, %v593
        %v598 = vsel %vm452, %v594, 0
        %v601 = vsel %vm452, %v595, 0
        %v604 = vsel %vm452, %v596, 0
        %606 = vmatprep.subr.bf16.mxu0 %v547
        %607 = vmatpush1.bf16.msra.mxu0 %v546
        %608 = vmatprep.subr.bf16.mxu0 0
        %609 = vmatpush1.bf16.msra.mxu0 0
        %610 = vmatprep.subr.bf16.mxu0 0
        %611 = vmatpush1.bf16.msra.mxu0 0
        %612 = vmatprep.subr.bf16.mxu0 0
        %613 = vmatpush1.bf16.msra.mxu0 0
        %614 = vmatprep.subr.bf16.mxu0 0
        %615 = vmatpush1.bf16.msra.mxu0 0
        %616 = vmatprep.subr.bf16.mxu0 0
        %617 = vmatpush1.bf16.msra.mxu0 0
        %618 = vmatprep.subr.bf16.mxu0 0
        %619 = vmatpush1.bf16.msra.mxu0 0
        %620 = vmatprep.subr.bf16.mxu0 0
        %621 = vmatpush1.bf16.msra.mxu0 0
        %622 = vmatprep.subr.bf16.mxu0 0
        %623 = vmatpush1.bf16.msra.mxu0 0
        %624 = vmatprep.subr.bf16.mxu0 0
        %625 = vmatpush1.bf16.msra.mxu0 0
        %626 = vmatprep.subr.bf16.mxu0 0
        %627 = vmatpush1.bf16.msra.mxu0 0
        %628 = vmatprep.subr.bf16.mxu0 0
        %629 = vmatpush1.bf16.msra.mxu0 0
        %630 = vmatprep.subr.bf16.mxu0 0
        %631 = vmatpush1.bf16.msra.mxu0 0
        %632 = vmatprep.subr.bf16.mxu0 0
        %633 = vmatpush1.bf16.msra.mxu0 0
        %634 = vmatprep.subr.bf16.mxu0 0
        %635 = vmatpush1.bf16.msra.mxu0 0
        %636 = vmatprep.subr.bf16.mxu0 0
        %637 = vmatpush1.bf16.msra.mxu0 0
        %638 = vmatprep.mubr.bf16.mxu0 0
        %639 = vmatmul.mubr.bf16.gmra.mrb[0].mxu0 %v598
        %v640 = vpop.f32.mrb[0].mxu0
        %v641 = vadd.f32 %v562, %v640
        %v642 = vpop.f32.mrb[0].mxu0
        %v643 = vadd.f32 %v562, %v642
        %v644 = vpop.f32.mrb[0].mxu0
        %v645 = vadd.f32 %v567, %v644
        %v646 = vpop.f32.mrb[0].mxu0
        %v647 = vadd.f32 %v567, %v646
        %648 = vmatprep.mubr.bf16.mxu0 0
        %649 = vmatmul.mubr.bf16.gmra.mrb[0].mxu0 %v601
        %v650 = vpop.f32.mrb[0].mxu0
        %v651 = vadd.f32 %v572, %v650
        %v652 = vpop.f32.mrb[0].mxu0
        %v653 = vadd.f32 %v572, %v652
        %v654 = vpop.f32.mrb[0].mxu0
        %v655 = vadd.f32 %v577, %v654
        %v656 = vpop.f32.mrb[0].mxu0
        %v657 = vadd.f32 %v577, %v656
        %658 = vmatprep.mubr.bf16.mxu0 0
        %659 = vmatmul.mubr.bf16.gmra.mrb[0].mxu0 %v604
        %v660 = vpop.f32.mrb[0].mxu0
        %v661 = vadd.f32 %v582, %v660
        %v662 = vpop.f32.mrb[0].mxu0
        %v663 = vadd.f32 %v582, %v662
        %v664 = vpop.f32.mrb[0].mxu0
        %v665 = vpop.f32.mrb[0].mxu0
        %666 = vdwg.mxu0
        %667 = vmatprep.subr.bf16.mxu0 0
        %668 = vmatpush1.bf16.msra.mxu0 %v548
        %669 = vmatprep.subr.bf16.mxu0 0
        %670 = vmatpush1.bf16.msra.mxu0 0
        %671 = vmatprep.subr.bf16.mxu0 0
        %672 = vmatpush1.bf16.msra.mxu0 0
        %673 = vmatprep.subr.bf16.mxu0 0
        %674 = vmatpush1.bf16.msra.mxu0 0
        %675 = vmatprep.subr.bf16.mxu0 0
        %676 = vmatpush1.bf16.msra.mxu0 0
        %677 = vmatprep.subr.bf16.mxu0 0
        %678 = vmatpush1.bf16.msra.mxu0 0
        %679 = vmatprep.subr.bf16.mxu0 0
        %680 = vmatpush1.bf16.msra.mxu0 0
        %681 = vmatprep.subr.bf16.mxu0 0
        %682 = vmatpush1.bf16.msra.mxu0 0
        %683 = vmatprep.subr.bf16.mxu0 0
        %684 = vmatpush1.bf16.msra.mxu0 0
        %685 = vmatprep.subr.bf16.mxu0 0
        %686 = vmatpush1.bf16.msra.mxu0 0
        %687 = vmatprep.subr.bf16.mxu0 0
        %688 = vmatpush1.bf16.msra.mxu0 0
        %689 = vmatprep.subr.bf16.mxu0 0
        %690 = vmatpush1.bf16.msra.mxu0 0
        %691 = vmatprep.subr.bf16.mxu0 0
        %692 = vmatpush1.bf16.msra.mxu0 0
        %693 = vmatprep.subr.bf16.mxu0 0
        %694 = vmatpush1.bf16.msra.mxu0 0
        %695 = vmatprep.subr.bf16.mxu0 0
        %696 = vmatpush1.bf16.msra.mxu0 0
        %697 = vmatprep.subr.bf16.mxu0 0
        %698 = vmatpush1.bf16.msra.mxu0 0
        %699 = vmatprep.mubr.bf16.mxu0 0
        %700 = vmatmul.mubr.bf16.gmra.mrb[0].mxu0 %v598
        %v701 = vpop.f32.mrb[0].mxu0
        %v702 = vadd.f32 %v562, %v701
        %v703 = vpop.f32.mrb[0].mxu0
        %v704 = vpop.f32.mrb[0].mxu0
        %v705 = vadd.f32 %v567, %v704
        %v706 = vpop.f32.mrb[0].mxu0
        %707 = vmatprep.mubr.bf16.mxu0 0
        %708 = vmatmul.mubr.bf16.gmra.mrb[0].mxu0 %v601
        %v709 = vpop.f32.mrb[0].mxu0
        %v710 = vadd.f32 %v572, %v709
        %v711 = vpop.f32.mrb[0].mxu0
        %v712 = vpop.f32.mrb[0].mxu0
        %v713 = vadd.f32 %v577, %v712
        %v714 = vpop.f32.mrb[0].mxu0
        %715 = vmatprep.mubr.bf16.mxu0 0
        %716 = vmatmul.mubr.bf16.gmra.mrb[0].mxu0 %v604
        %v717 = vpop.f32.mrb[0].mxu0
        %v718 = vadd.f32 %v582, %v717
        %v719 = vpop.f32.mrb[0].mxu0
        %v720 = vpop.f32.mrb[0].mxu0
        %v721 = vpop.f32.mrb[0].mxu0
        %722 = vdwg.mxu0
        %v723 = vmin.f32 %v655, 4.1351666
        %v724 = vmin.f32 %v657, 4.1351666
        %v725 = vmin.f32 %v713, 4.1351666
        %v726 = vmin.f32 %v661, 4.1351666
        %v727 = vmin.f32 %v663, 4.1351666
        %v728 = vmin.f32 %v718, 4.1351666
        %v729 = vld [vmem:[%s5] sm:$0xff]
        %v730 = vld [vmem:[%s5 + $0x8] sm:$0xff]
        %v731 = vld [vmem:[%s5 + $0x10] sm:$0xff]
        %v732 = vld [vmem:[%s5 + $0x18] sm:$0xff]
        %v733 = vld [vmem:[%s5 + $0x20] sm:$0xff]
        %v734 = vld [vmem:[%s5 + $0x28] sm:$0xff]
        %v735 = vld [vmem:[%s5 + $0x30] sm:$0xff]
        %v736 = vld [vmem:[%s5 + $0x38] sm:$0xff]
        %v737 = vld [vmem:[%s5 + $0x40] sm:$0xff]
        %v738 = vld [vmem:[%s5 + $0x48] sm:$0xff]
        %v739 = vld [vmem:[%s5 + $0x50] sm:$0xff]
        %v740 = vld [vmem:[%s5 + $0x58] sm:$0xff]
        %v741 = vsub.f32 %v735, %v729
        %v742 = vsub.f32 %v736, %v730
        %v743 = vsub.f32 %v737, %v731
        %v744 = vsub.f32 %v738, %v732
        %v745 = vsub.f32 %v739, %v733
        %v746 = vsub.f32 %v740, %v734
        %v747 = vmul.f32 %v741, 0.5
        %v748 = vmul.f32 %v742, 0.5
        %v749 = vmul.f32 %v743, 0.5
        %v750 = vadd.f32 %v729, %v747
        %v751 = vadd.f32 %v730, %v748
        %v752 = vadd.f32 %v731, %v749
        %v753 = vmul.f32 %v744, 0.5
        %v754 = vmul.f32 %v745, 0.5
        %v755 = vmul.f32 %v746, 0.5
        %v756 = vadd.f32 %v732, %v753
        %v757 = vadd.f32 %v733, %v754
        %v758 = vadd.f32 %v734, %v755
        %v759 = vmul.f32 %v645, %v741
        %v760 = vmul.f32 %v647, %v742
        %v761 = vmul.f32 %v705, %v743
        %v762 = vadd.f32 %v759, %v750
        %v763 = vadd.f32 %v760, %v751
        %v764 = vadd.f32 %v761, %v752
        %v765 = vmul.f32 %v651, %v744
        %v766 = vmul.f32 %v653, %v745
        %v767 = vmul.f32 %v710, %v746
        %v768 = vadd.f32 %v765, %v756
        %v769 = vadd.f32 %v766, %v757
        %v770 = vadd.f32 %v767, %v758
        %v771 = vmul.f32 %v723, 1.442695
        %v772 = vpow.pop %v771
        %v773 = vmul.f32 %v724, 1.442695
        %v774 = vpow.pop %v773
        %v775 = vmul.f32 %v725, 1.442695
        %v776 = vpow.pop %v775
        %v777 = vmul.f32 %v772, %v741
        %v778 = vmul.f32 %v774, %v742
        %v779 = vmul.f32 %v776, %v743
        %v780 = vmul.f32 %v726, 1.442695
        %v781 = vpow.pop %v780
        %v782 = vmul.f32 %v727, 1.442695
        %v783 = vpow.pop %v782
        %v784 = vmul.f32 %v728, 1.442695
        %v785 = vpow.pop %v784
        %v786 = vmul.f32 %v781, %v744
        %v787 = vmul.f32 %v783, %v745
        %v788 = vmul.f32 %v785, %v746
        %v789 = vmul.f32 %v777, 0.5
        %v790 = vmul.f32 %v778, 0.5
        %v791 = vmul.f32 %v779, 0.5
        %v792 = vsub.f32 %v762, %v789
        %v793 = vsub.f32 %v763, %v790
        %v794 = vsub.f32 %v764, %v791
        %v795 = vmul.f32 %v786, 0.5
        %v796 = vmul.f32 %v787, 0.5
        %v797 = vmul.f32 %v788, 0.5
        %v798 = vsub.f32 %v768, %v795
        %v799 = vsub.f32 %v769, %v796
        %v800 = vsub.f32 %v770, %v797
        %v801 = vadd.f32 %v762, %v789
        %v802 = vadd.f32 %v763, %v790
        %v803 = vadd.f32 %v764, %v791
        %v804 = vadd.f32 %v768, %v795
        %v805 = vadd.f32 %v769, %v796
        %v806 = vadd.f32 %v770, %v797
        %807 = vst [vmem:[%s284] sm:$0xff] %v641
        %808 = vst [vmem:[%s284 + $0x8] sm:$0xff] %v643
        %809 = vst [vmem:[%s284 + $0x10] sm:$0xff] %v702
        %810 = vst [vmem:[%s284 + $0x18] sm:$0xff] %v792
        %811 = vst [vmem:[%s284 + $0x20] sm:$0xff] %v793
        %812 = vst [vmem:[%s284 + $0x28] sm:$0xff] %v794
        %813 = vst [vmem:[%s284 + $0x30] sm:$0xff] %v798
        %814 = vst [vmem:[%s284 + $0x38] sm:$0xff] %v799
        %815 = vst [vmem:[%s284 + $0x40] sm:$0xff] %v800
        %816 = vst [vmem:[%s284 + $0x48] sm:$0xff] %v801
        %817 = vst [vmem:[%s284 + $0x50] sm:$0xff] %v802
        %818 = vst [vmem:[%s284 + $0x58] sm:$0xff] %v803
        %819 = vst [vmem:[%s284 + $0x60] sm:$0xff] %v804
        %820 = vst [vmem:[%s284 + $0x68] sm:$0xff] %v805
        %821 = vst [vmem:[%s284 + $0x70] sm:$0xff] %v806
        %s822 = sand.u32 %s163, 1
        %s823 = scalar_lea.sflag [#allocation4], %s822
        %s824 = sand.u32 %s163, 1
        %s825 = smul.addr %s824, 120
        %s826 = scalar_lea.vmem [#allocation7], %s825
        // Predicated region
        $region53: #{tpu_custom_call.1} parent=43 // pred_check
          %p827 = pneg %p173
        $region54: #{tpu_custom_call.1} parent=43 // pred_check_branch
          %829 = sbr.rel (%p827) target = $region56
        $region55: #{tpu_custom_call.1} parent=43 // pred_region
          %s831 = ssub.s32 1920, 1920
          %832 = vsyncadd %s823, %s831
          %s833 = smul.addr %s24, 15
          %s834 = smul.addr %s833, 128
          %s835 = scalar_lea.hbm %s6, %s834
          %s836 = sshll.u32 %s826, 4
          %s837 = int_to_ptr.vmem [resolvable:$true] %s836
          %842 = dma.vmem_to_hbm [thread:$0]  %s837, 1920, %s835, %s823, 384, 384, 24
        $region56: #{tpu_custom_call.1} parent=43 // pred_fallthru
          _
      $region44: #{tpu_custom_call.1} parent=5 // pred_fallthru
        _
      %p843 = scmp.le.s32.totalorder 2, %s19
      // Predicated region
      $region57: #{tpu_custom_call.1} parent=5 // pred_check
        %p844 = pneg %p843
      $region58: #{tpu_custom_call.1} parent=5 // pred_check_branch
        %846 = sbr.rel (%p844) target = $region60
      $region59: #{tpu_custom_call.1} parent=5 // pred_region
        %s847 = ssub.s32 %s19, 2
        // Predicated region
        $region61: #{tpu_custom_call.1} parent=59 // pred_check
          %p848 = pneg %p179
        $region62: #{tpu_custom_call.1} parent=59 // pred_check_branch
          %850 = sbr.rel (%p848) target = $region64
        $region63: #{tpu_custom_call.1} parent=59 // pred_region
          %s851 = sand.u32 %s164, 1
          %s852 = scalar_lea.sflag [#allocation4], %s851
          %s853 = sand.u32 %s164, 1
          %s854 = smul.addr %s853, 120
          %s855 = scalar_lea.vmem [#allocation7], %s854
          %856 = dma.done %s852, 1920
        $region64: #{tpu_custom_call.1} parent=59 // pred_fallthru
          _
      $region60: #{tpu_custom_call.1} parent=5 // pred_fallthru
        _
    $region6: #{tpu_custom_call.1} parent=1 // loop_footer
      %s23 = sadd.s32 1, %s19
    $region7: #{tpu_custom_call.1} parent=1 // loop_footer_branch
      %18 = sbr.rel target = $region3
    $region8: #{tpu_custom_call.1} parent=1 // loop_exit
      _
    %857 = vsyncpa [#allocation3], 1
    %s858 = scalar_lea.sflag [#allocation3], 1
    %859 = vsyncpa %s858, 1
    %860 = vsyncpa [#allocation6], 1
    %861 = vsyncpa [#allocation4], 1
    %s862 = scalar_lea.sflag [#allocation4], 1
    %863 = vsyncpa %s862, 1

</llo_original>
